<compile_context>
chip_gen: v6e
topology: v6e:2x2x1
jax: 0.10.0
libtpu: 0.0.40
codegen_flags: <defaults>
</compile_context>

<pallas_src>
import jax
import jax.numpy as jnp
from jax.experimental import pallas as pl
from jax.experimental.pallas import tpu as pltpu


def _round_up(v, m):
    return ((v + m - 1) // m) * m


def _cdiv(a, b):
    return (a + b - 1) // b


def _vmem_budget_bytes():
    """Per-core VMEM limit with headroom for compiler scratch / semaphores."""
    phys = 64 * 1024 * 1024  # conservative default (v7x per-TC physical VMEM)
    try:
        info = pltpu.get_tpu_info()
        phys = int(getattr(info, "vmem_capacity_bytes", phys))
    except Exception:
        pass
    # ~56 MiB on v7x (64 MiB phys), capped at 112 MiB on 128 MiB v5e / v6e.
    return max(32 * 1024 * 1024, min(phys - 8 * 1024 * 1024, 112 * 1024 * 1024))


def _pick_divisor_tile(total, target, granule=128):
    """Largest multiple of `granule` dividing `total` that is <= target."""
    best = granule
    t = granule
    while t <= total:
        if total % t == 0 and t <= target:
            best = t
        t += granule
    return best


# ----------------------------- kernels --------------------------------------


def _ffn_kernel_resident(x_ref, w1_ref, b1_ref, w2_ref, b2_ref, o_ref):
    """Weights fully VMEM-resident: one row tile in, one row tile out."""
    x = x_ref[...]
    h = jnp.dot(x, w1_ref[...], preferred_element_type=jnp.float32)
    h = jnp.maximum(h + b1_ref[...].astype(jnp.float32), 0.0)          # ReLU
    # TODO(synk): dropout1/dropout2 omitted (identity in eval / inference mode).
    y = jnp.dot(h.astype(w2_ref.dtype), w2_ref[...],
                preferred_element_type=jnp.float32)
    y = y + x.astype(jnp.float32) + b2_ref[...].astype(jnp.float32)    # +b2, +residual
    o_ref[...] = y.astype(o_ref.dtype)


def _ffn_kernel_tiled(x_ref, w1_ref, b1_ref, w2_ref, b2_ref, o_ref, acc_ref):
    """FFN dimension tiled: f32 accumulator over the k (ff-dim) grid axis."""
    k = pl.program_id(1)

    @pl.when(k == 0)
    def _init():
        # Residual + output bias, held once in the f32 accumulator.
        acc_ref[...] = (x_ref[...].astype(jnp.float32)
                        + b2_ref[...].astype(jnp.float32))

    h = jnp.dot(x_ref[...], w1_ref[...], preferred_element_type=jnp.float32)
    h = jnp.maximum(h + b1_ref[...].astype(jnp.float32), 0.0)          # ReLU
    # TODO(synk): dropout1/dropout2 omitted (identity in eval / inference mode).
    acc_ref[...] += jnp.dot(h.astype(w2_ref.dtype), w2_ref[...],
                            preferred_element_type=jnp.float32)

    @pl.when(k == pl.num_programs(1) - 1)
    def _finalize():
        o_ref[...] = acc_ref[...].astype(o_ref.dtype)


# --------------------------- pallas_call builder -----------------------------


def _ffn_pallas(x2d, w1t, b1r, w2t, b2r, *, tile_m, tile_f, vmem_limit):
    M_pad, H_pad = x2d.shape
    F_pad = w1t.shape[1]
    dt = x2d.dtype
    itemsize = jnp.dtype(dt).itemsize
    n_row = M_pad // tile_m
    resident = tile_f >= F_pad

    flops = 4 * M_pad * H_pad * F_pad
    weight_fetches = 1 if resident else n_row          # weights re-stream per row tile
    bytes_accessed = itemsize * (
        2 * M_pad * H_pad                               # x in + out
        + weight_fetches * (2 * H_pad * F_pad + F_pad)  # W1, W2, b1 streams
        + H_pad)                                        # b2
    cost = pl.CostEstimate(flops=flops, transcendentals=0,
                           bytes_accessed=bytes_accessed)

    if resident:
        grid = (n_row,)
        in_specs = [
            pl.BlockSpec((tile_m, H_pad), lambda i: (i, 0)),    # x rows
            pl.BlockSpec((H_pad, F_pad), lambda i: (0, 0)),     # W1^T (resident)
            pl.BlockSpec((1, F_pad), lambda i: (0, 0)),         # b1
            pl.BlockSpec((F_pad, H_pad), lambda i: (0, 0)),     # W2^T (resident)
            pl.BlockSpec((1, H_pad), lambda i: (0, 0)),         # b2
        ]
        out_specs = pl.BlockSpec((tile_m, H_pad), lambda i: (i, 0))
        kernel = _ffn_kernel_resident
        scratch = []
        semantics = ("parallel",)
    else:
        grid = (n_row, F_pad // tile_f)
        in_specs = [
            pl.BlockSpec((tile_m, H_pad), lambda i, k: (i, 0)),  # x rows
            pl.BlockSpec((H_pad, tile_f), lambda i, k: (0, k)),  # W1^T slice
            pl.BlockSpec((1, tile_f), lambda i, k: (0, k)),      # b1 slice
            pl.BlockSpec((tile_f, H_pad), lambda i, k: (k, 0)),  # W2^T slice
            pl.BlockSpec((1, H_pad), lambda i, k: (0, 0)),       # b2
        ]
        out_specs = pl.BlockSpec((tile_m, H_pad), lambda i, k: (i, 0))
        kernel = _ffn_kernel_tiled
        scratch = [pltpu.VMEM((tile_m, H_pad), jnp.float32)]
        semantics = ("parallel", "arbitrary")

    return pl.pallas_call(
        kernel,
        out_shape=jax.ShapeDtypeStruct((M_pad, H_pad), dt),
        grid_spec=pltpu.PrefetchScalarGridSpec(
            num_scalar_prefetch=0,
            grid=grid,
            in_specs=in_specs,
            out_specs=out_specs,
            scratch_shapes=scratch,
        ),
        compiler_params=pltpu.CompilerParams(
            dimension_semantics=semantics,
            vmem_limit_bytes=vmem_limit,
        ),
        cost_estimate=cost,
    )(x2d, w1t, b1r, w2t, b2r)


# ------------------------------ public API -----------------------------------


def make_positionwise_ffn(w1, b1, w2, b2, *, param_dtype=None,
                          tile_m=None, tile_f=None):
    """Prepare (transpose / pad / cast) the Conv1d weights once and return a
    jitted callable  x (B, L, H)  ->  PositionwiseFeedForward(x).

    PyTorch Conv1d layouts: w1 (F, H, 1), b1 (F,), w2 (H, F, 1), b2 (H,).
    Pass param_dtype=jnp.bfloat16 to use the bf16 MXU path (recommended on
    v5e); accumulation, bias and residual adds stay f32 inside the kernel.
    """
    F, H = int(w1.shape[0]), int(w1.shape[1])
    dt = jnp.dtype(param_dtype) if param_dtype is not None else jnp.dtype(w1.dtype)
    H_pad = _round_up(H, 128)
    F_pad = _round_up(F, 128)

    # Hoisted out of the per-call hot path: padded, pre-transposed, pre-cast.
    w1t = jnp.pad(jnp.transpose(w1[:, :, 0]).astype(dt),
                  ((0, H_pad - H), (0, F_pad - F)))            # (H_pad, F_pad)
    w2t = jnp.pad(jnp.transpose(w2[:, :, 0]).astype(dt),
                  ((0, F_pad - F), (0, H_pad - H)))            # (F_pad, H_pad)
    b1r = jnp.pad(b1.astype(dt).reshape(1, F), ((0, 0), (0, F_pad - F)))
    b2r = jnp.pad(b2.astype(dt).reshape(1, H), ((0, 0), (0, H_pad - H)))

    itemsize = dt.itemsize
    sublane = 16 if itemsize == 2 else 8            # bf16 needs (16, 128) tiles
    vmem_limit = _vmem_budget_bytes()
    budget = int(0.85 * vmem_limit)
    req_tile_m, req_tile_f = tile_m, tile_f

    @jax.jit
    def apply(x):
        B, L, H_in = x.shape
        assert H_in == H, f"expected hidden dim {H}, got {H_in}"
        M = B * L

        # ---- row tile: avoid mostly-padding last tiles; keep >= 2 row tiles
        # when possible (only the row axis is 'parallel'; v7x has 2 TCs).
        if req_tile_m is not None:
            tm = max(sublane, _round_up(min(req_tile_m, M), sublane))
        else:
            target = 512
            tm = _round_up(_cdiv(M, max(1, _cdiv(M, target))), sublane)
            if _cdiv(M, tm) < 2:
                half = _round_up(_cdiv(M, 2), sublane)
                if half < tm:
                    tm = half

        # ---- FFN-dim tile: weights-resident fast path whenever VMEM allows.
        def fast_bytes(tm_):
            return (2 * 2 * H_pad * F_pad * itemsize     # W1^T + W2^T (2 bufs)
                    + 4 * tm_ * H_pad * itemsize         # x + out blocks (2 bufs)
                    + 2 * (F_pad + H_pad) * itemsize     # biases (2 bufs)
                    + tm_ * F_pad * (4 + itemsize))      # f32 h + downcast copy

        def tiled_bytes(tm_, tf_):
            return (4 * tm_ * H_pad * itemsize           # x + out blocks (2 bufs)
                    + 4 * H_pad * tf_ * itemsize         # W1/W2 slices (2 bufs)
                    + 2 * (tf_ + H_pad) * itemsize       # bias slices (2 bufs)
                    + tm_ * H_pad * 4                    # f32 accumulator
                    + tm_ * tf_ * (4 + itemsize))        # f32 h + downcast copy

        if req_tile_f is not None:
            tf = _pick_divisor_tile(F_pad, max(128, _round_up(req_tile_f, 128)))
        elif fast_bytes(tm) <= budget:
            tf = F_pad                                    # weights-resident path
        else:
            tf = _pick_divisor_tile(F_pad, 2048)

        if tf < F_pad:
            # Tiled fallback: shrink tiles until the working set fits VMEM.
            # (Possible further v5e tweak: pipeline_mode=pl.Buffered(3) on the
            #  weight BlockSpecs to deepen the weight-DMA pipeline.)
            while tiled_bytes(tm, tf) > budget and tf > 128:
                tf = _pick_divisor_tile(F_pad, tf // 2)
            while tiled_bytes(tm, tf) > budget and tm > sublane:
                tm = max(sublane, _round_up(tm // 2, sublane))

        M_pad = _round_up(M, tm)

        x2d = jnp.pad(x.astype(dt).reshape(M, H),
                      ((0, M_pad - M), (0, H_pad - H)))

        out2d = _ffn_pallas(x2d, w1t, b1r, w2t, b2r,
                            tile_m=tm, tile_f=tf, vmem_limit=vmem_limit)
        return out2d[:M, :H].reshape(B, L, H)

    return apply


def positionwise_ffn(x, w1, b1, w2, b2, **kwargs):
    """One-shot convenience wrapper (use make_positionwise_ffn for hot paths)."""
    return make_positionwise_ffn(w1, b1, w2, b2, param_dtype=x.dtype, **kwargs)(x)


def reference(x, w1, b1, w2, b2):
    h = jnp.einsum("blh,fh->blf", x, w1[:, :, 0]) + b1
    h = jnp.maximum(h, 0.0)
    y = jnp.einsum("blf,hf->blh", h, w2[:, :, 0]) + b2
    return y + x


if __name__ == "__main__":
    key = jax.random.PRNGKey(0)
    k1, k2, k3, k4, k5, k6, k7, k8 = jax.random.split(key, 8)

    # SASRec-scale small demo shapes.
    hidden_dim, ff_dim = 32, 64
    B, L = 2, 8

    bound1 = 1.0 / (hidden_dim ** 0.5)
    bound2 = 1.0 / (ff_dim ** 0.5)
    w1 = jax.random.uniform(k1, (ff_dim, hidden_dim, 1), jnp.float32, -bound1, bound1)
    b1 = jax.random.uniform(k2, (ff_dim,), jnp.float32, -bound1, bound1)
    w2 = jax.random.uniform(k3, (hidden_dim, ff_dim, 1), jnp.float32, -bound2, bound2)
    b2 = jax.random.uniform(k4, (hidden_dim,), jnp.float32, -bound2, bound2)
    x = jax.random.normal(k5, (B, L, hidden_dim), jnp.float32)

    ref = reference(x, w1, b1, w2, b2)

    # 1) f32, weights-resident fast path (weights prepared once, call jitted).
    ffn_f32 = make_positionwise_ffn(w1, b1, w2, b2, param_dtype=jnp.float32)
    out = jax.block_until_ready(ffn_f32(x))
    assert out.shape == x.shape and out.dtype == jnp.float32
    assert jnp.allclose(out, ref, atol=1e-5, rtol=1e-5)

    # 2) bf16 operand path (bf16 MXU inputs, f32 accumulation inside kernel).
    ffn_bf16 = make_positionwise_ffn(w1, b1, w2, b2, param_dtype=jnp.bfloat16)
    out_bf16 = jax.block_until_ready(ffn_bf16(x.astype(jnp.bfloat16)))
    assert out_bf16.dtype == jnp.bfloat16
    assert jnp.allclose(out_bf16.astype(jnp.float32), ref, atol=1e-1, rtol=1e-1)

    # 3) exercise the tiled (F-dim accumulator) fallback at small shapes.
    ff_dim2 = 256
    bound3 = 1.0 / (ff_dim2 ** 0.5)
    w1b = jax.random.uniform(k6, (ff_dim2, hidden_dim, 1), jnp.float32, -bound1, bound1)
    b1b = jax.random.uniform(k7, (ff_dim2,), jnp.float32, -bound1, bound1)
    w2b = jax.random.uniform(k8, (hidden_dim, ff_dim2, 1), jnp.float32, -bound3, bound3)
    b2b = b2
    ref2 = reference(x, w1b, b1b, w2b, b2b)
    ffn_tiled = make_positionwise_ffn(w1b, b1b, w2b, b2b,
                                      param_dtype=jnp.float32, tile_f=128)
    out2 = jax.block_until_ready(ffn_tiled(x))
    assert jnp.allclose(out2, ref2, atol=1e-5, rtol=1e-5)

    print("KERNEL_OK")
</pallas_src>

<mosaic_0001>
module attributes {stable_mosaic.version = 11 : i64} {
  func.func @_ffn_kernel_resident(%arg0: i32, %arg1: memref<8x128xf32, #tpu.memory_space<vmem>>, %arg2: memref<128x128xf32, #tpu.memory_space<vmem>>, %arg3: memref<1x128xf32, #tpu.memory_space<vmem>>, %arg4: memref<128x128xf32, #tpu.memory_space<vmem>>, %arg5: memref<1x128xf32, #tpu.memory_space<vmem>>, %arg6: memref<8x128xf32, #tpu.memory_space<vmem>>) attributes {dimension_semantics = [#tpu.dimension_semantics<parallel>], iteration_bounds = array<i64: 2>, scalar_prefetch = 0 : i64, scratch_operands = 0 : i64, tpu.core_type = #tpu.core_type<tc>, window_params = [{transform_indices = @transform_0, window_bounds = array<i64: 8, 128>}, {pipeline_mode = #tpu.pipeline_mode<synchronous>, transform_indices = @transform_1, window_bounds = array<i64: 128, 128>}, {pipeline_mode = #tpu.pipeline_mode<synchronous>, transform_indices = @transform_2, window_bounds = array<i64: 1, 128>}, {pipeline_mode = #tpu.pipeline_mode<synchronous>, transform_indices = @transform_3, window_bounds = array<i64: 128, 128>}, {pipeline_mode = #tpu.pipeline_mode<synchronous>, transform_indices = @transform_4, window_bounds = array<i64: 1, 128>}, {transform_indices = @transform_5, window_bounds = array<i64: 8, 128>}]} {
    %c0 = arith.constant 0 : index
    %c0_0 = arith.constant 0 : index
    %0 = vector.load %arg1[%c0, %c0_0] : memref<8x128xf32, #tpu.memory_space<vmem>>, vector<8x128xf32>
    %c0_1 = arith.constant 0 : index
    %c0_2 = arith.constant 0 : index
    %1 = vector.load %arg2[%c0_1, %c0_2] : memref<128x128xf32, #tpu.memory_space<vmem>>, vector<128x128xf32>
    %cst = arith.constant dense<0.000000e+00> : vector<8x128xf32>
    %2 = tpu.matmul %0, %1, %cst {dimension_numbers = #tpu.dot_dimension_numbers<[1], [0], [0], [1], [0, 0, 1, 1], [], []>} : vector<8x128xf32>, vector<128x128xf32>, vector<8x128xf32> -> vector<8x128xf32>
    %c0_3 = arith.constant 0 : index
    %c0_4 = arith.constant 0 : index
    %3 = vector.load %arg3[%c0_3, %c0_4] : memref<1x128xf32, #tpu.memory_space<vmem>>, vector<1x128xf32>
    %4 = vector.broadcast %3 : vector<1x128xf32> to vector<8x128xf32>
    %5 = arith.addf %2, %4 : vector<8x128xf32>
    %cst_5 = arith.constant 0.000000e+00 : f32
    %6 = vector.broadcast %cst_5 : f32 to vector<8x128xf32>
    %7 = arith.maximumf %5, %6 : vector<8x128xf32>
    %c0_6 = arith.constant 0 : index
    %c0_7 = arith.constant 0 : index
    %8 = vector.load %arg4[%c0_6, %c0_7] : memref<128x128xf32, #tpu.memory_space<vmem>>, vector<128x128xf32>
    %cst_8 = arith.constant dense<0.000000e+00> : vector<8x128xf32>
    %9 = tpu.matmul %7, %8, %cst_8 {dimension_numbers = #tpu.dot_dimension_numbers<[1], [0], [0], [1], [0, 0, 1, 1], [], []>} : vector<8x128xf32>, vector<128x128xf32>, vector<8x128xf32> -> vector<8x128xf32>
    %10 = arith.addf %9, %0 : vector<8x128xf32>
    %c0_9 = arith.constant 0 : index
    %c0_10 = arith.constant 0 : index
    %11 = vector.load %arg5[%c0_9, %c0_10] : memref<1x128xf32, #tpu.memory_space<vmem>>, vector<1x128xf32>
    %12 = vector.broadcast %11 : vector<1x128xf32> to vector<8x128xf32>
    %13 = arith.addf %10, %12 : vector<8x128xf32>
    %c0_11 = arith.constant 0 : index
    %c0_12 = arith.constant 0 : index
    %14 = vector.load %arg6[%c0_11, %c0_12] : memref<8x128xf32, #tpu.memory_space<vmem>>, vector<8x128xf32>
    tpu.vector_store %arg6[%c0_11, %c0_12], %13 {strides = array<i32>} : memref<8x128xf32, #tpu.memory_space<vmem>>, vector<8x128xf32>,
    return
  }
  func.func @transform_0(%arg0: i32) -> (i32, i32) {
    %c0_i32 = arith.constant 0 : i32
    %c0_i32_0 = arith.constant 0 : i32
    return %arg0, %c0_i32 : i32, i32
  }
  func.func @transform_1(%arg0: i32) -> (i32, i32) {
    %c0_i32 = arith.constant 0 : i32
    %c0_i32_0 = arith.constant 0 : i32
    %c0_i32_1 = arith.constant 0 : i32
    return %c0_i32, %c0_i32_0 : i32, i32
  }
  func.func @transform_2(%arg0: i32) -> (i32, i32) {
    %c0_i32 = arith.constant 0 : i32
    %c0_i32_0 = arith.constant 0 : i32
    %c0_i32_1 = arith.constant 0 : i32
    return %c0_i32, %c0_i32_0 : i32, i32
  }
  func.func @transform_3(%arg0: i32) -> (i32, i32) {
    %c0_i32 = arith.constant 0 : i32
    %c0_i32_0 = arith.constant 0 : i32
    %c0_i32_1 = arith.constant 0 : i32
    return %c0_i32, %c0_i32_0 : i32, i32
  }
  func.func @transform_4(%arg0: i32) -> (i32, i32) {
    %c0_i32 = arith.constant 0 : i32
    %c0_i32_0 = arith.constant 0 : i32
    %c0_i32_1 = arith.constant 0 : i32
    return %c0_i32, %c0_i32_0 : i32, i32
  }
  func.func @transform_5(%arg0: i32) -> (i32, i32) {
    %c0_i32 = arith.constant 0 : i32
    %c0_i32_0 = arith.constant 0 : i32
    return %arg0, %c0_i32 : i32, i32
  }
}

</mosaic_0001>

<llo_original>
// kernel: apply.1
$region0: #{apply.1}
  #allocation0 [shape = 'u32[]', space=smem, size = 0x4, offset = 0x4, fixed_abs, tag = 'smem constant byte address 0x4 - core index']
  #allocation1 [shape = 'u32[144,128]{1,0:T(1,128)}', space=vmem, size = 0x12000, scoped, tag = 'internal scratch']
  %s0 = inlined_call_operand.vmem [shape: f32[16,128], index: 0, kind: input, shape index: {}]
  %s1 = inlined_call_operand.hbm [shape: f32[128,128], index: 1, kind: input, shape index: {}]
  %s2 = inlined_call_operand.vmem [shape: f32[1,128], index: 2, kind: input, shape index: {}]
  %s3 = inlined_call_operand.hbm [shape: f32[128,128], index: 3, kind: input, shape index: {}]
  %s4 = inlined_call_operand.vmem [shape: f32[1,128], index: 4, kind: input, shape index: {}]
  %s5 = inlined_call_operand.vmem [shape: f32[16,128], index: 5, kind: output, shape index: {}]
  %s6 = sld [smem:[#allocation0]]
  $region61: #{apply.1} parent=0
    _
  %s8 = ssub.s32 1, %s6
  %s9 = scalar_select 0, %s8, %s6
  $region1: #{apply.1} parent=0
    #allocation2 [shape = 'u8[65536]{0}', space=vmem, size = 0x10000, scoped, tag = 'input window, operand 1, single buffered']
    #allocation3 [shape = 's32[2]{0}', space=sflag, size = 0x8, scoped, tag = 'scoped memory for apply.1']
    #allocation4 [shape = 'u8[65536]{0}', space=vmem, size = 0x10000, scoped, tag = 'input window, operand 3, single buffered']
    #allocation5 [shape = 's32[1]{0}', space=sflag, size = 0x4, scoped, tag = 'scoped memory for apply.1']
    %10 = vsyncpa [#allocation3], 0
    %11 = vsyncpa [#allocation5], 0
    loop: start=0, step=1, limit=4
    $region2: #{apply.1} parent=1 // loop_pre_header
      _
    $region3: #{apply.1} parent=1 // loop_header
      %s13 = sphi 0, %s17
      %p14 = scmp.ge.s32.totalorder %s13, 4
      %s23 = sphi 0, %s25
      %s26 = sphi 0, %s23
      %s27 = sphi 0, %s26
      %s43 = sphi 0, %s27
      %s47 = sphi 0, %s47
      %s49 = sphi 0, %s47
      %s50 = sphi 0, %s49
      %s64 = sphi 0, %s50
      %s68 = sphi 0, %s68
      %s70 = sphi 0, %s68
      %s71 = sphi 0, %s70
      %s85 = sphi 0, %s71
      %s89 = sphi 0, %s89
      %s91 = sphi 0, %s89
      %s92 = sphi 0, %s91
      %s106 = sphi 0, %s92
      %s110 = sphi 0, %s110
      %s112 = sphi 0, %s110
      %s113 = sphi 0, %s112
      %s127 = sphi 0, %s113
      %s133 = sphi 0, %s135
      %s136 = sphi 0, %s133
      %s137 = sphi 0, %s136
      %s153 = sphi 0, %s137
    $region4: #{apply.1} parent=1 // loop_header_branch
      %16 = sbr.rel (%p14) target = $region8
    $region5: #{apply.1} parent=1 // loop_body
      %s18 = ssub.s32 %s13, 1
      %s19 = ssub.s32 %s13, 2
      %s20 = sadd.s32 %s13, 1
      %s21 = ssub.s32 %s13, %s20
      %p22 = scmp.eq.s32.totalorder %s21, 0
      %s24 = sadd.s32 %s23, 1
      %s25 = scalar_select %p22, %s23, %s24
      %p28 = pneg %p22
      %p29 = scmp.eq.s32.totalorder %s13, 1
      %p30 = por %p28, %p29
      %p31 = scmp.ne.s32.totalorder %s23, %s26
      %p32 = scmp.eq.s32.totalorder %s13, 0
      %p33 = por %p31, %p32
      %p34 = scmp.ne.s32.totalorder %s23, %s26
      %p35 = scmp.eq.s32.totalorder %s18, 1
      %p36 = por %p34, %p35
      %p37 = scmp.ne.s32.totalorder %s26, %s27
      %p38 = scmp.eq.s32.totalorder %s18, 0
      %p39 = por %p37, %p38
      %p40 = scmp.ne.s32.totalorder %s26, %s27
      %p41 = scmp.eq.s32.totalorder %s19, 1
      %p42 = por %p40, %p41
      %p44 = scmp.ne.s32.totalorder %s27, %s43
      %p45 = scmp.eq.s32.totalorder %s19, 0
      %p46 = por %p44, %p45
      %s48 = sadd.s32 %s47, 1
      %p51 = scmp.eq.s32.totalorder %s13, 1
      %p52 = scmp.ne.s32.totalorder %s47, %s49
      %p53 = scmp.eq.s32.totalorder %s13, 0
      %p54 = por %p52, %p53
      %p55 = scmp.ne.s32.totalorder %s47, %s49
      %p56 = scmp.eq.s32.totalorder %s18, 1
      %p57 = por %p55, %p56
      %p58 = scmp.ne.s32.totalorder %s49, %s50
      %p59 = scmp.eq.s32.totalorder %s18, 0
      %p60 = por %p58, %p59
      %p61 = scmp.ne.s32.totalorder %s49, %s50
      %p62 = scmp.eq.s32.totalorder %s19, 1
      %p63 = por %p61, %p62
      %p65 = scmp.ne.s32.totalorder %s50, %s64
      %p66 = scmp.eq.s32.totalorder %s19, 0
      %p67 = por %p65, %p66
      %s69 = sadd.s32 %s68, 1
      %p72 = scmp.eq.s32.totalorder %s13, 1
      %p73 = scmp.ne.s32.totalorder %s68, %s70
      %p74 = scmp.eq.s32.totalorder %s13, 0
      %p75 = por %p73, %p74
      %p76 = scmp.ne.s32.totalorder %s68, %s70
      %p77 = scmp.eq.s32.totalorder %s18, 1
      %p78 = por %p76, %p77
      %p79 = scmp.ne.s32.totalorder %s70, %s71
      %p80 = scmp.eq.s32.totalorder %s18, 0
      %p81 = por %p79, %p80
      %p82 = scmp.ne.s32.totalorder %s70, %s71
      %p83 = scmp.eq.s32.totalorder %s19, 1
      %p84 = por %p82, %p83
      %p86 = scmp.ne.s32.totalorder %s71, %s85
      %p87 = scmp.eq.s32.totalorder %s19, 0
      %p88 = por %p86, %p87
      %s90 = sadd.s32 %s89, 1
      %p93 = scmp.eq.s32.totalorder %s13, 1
      %p94 = scmp.ne.s32.totalorder %s89, %s91
      %p95 = scmp.eq.s32.totalorder %s13, 0
      %p96 = por %p94, %p95
      %p97 = scmp.ne.s32.totalorder %s89, %s91
      %p98 = scmp.eq.s32.totalorder %s18, 1
      %p99 = por %p97, %p98
      %p100 = scmp.ne.s32.totalorder %s91, %s92
      %p101 = scmp.eq.s32.totalorder %s18, 0
      %p102 = por %p100, %p101
      %p103 = scmp.ne.s32.totalorder %s91, %s92
      %p104 = scmp.eq.s32.totalorder %s19, 1
      %p105 = por %p103, %p104
      %p107 = scmp.ne.s32.totalorder %s92, %s106
      %p108 = scmp.eq.s32.totalorder %s19, 0
      %p109 = por %p107, %p108
      %s111 = sadd.s32 %s110, 1
      %p114 = scmp.eq.s32.totalorder %s13, 1
      %p115 = scmp.ne.s32.totalorder %s110, %s112
      %p116 = scmp.eq.s32.totalorder %s13, 0
      %p117 = por %p115, %p116
      %p118 = scmp.ne.s32.totalorder %s110, %s112
      %p119 = scmp.eq.s32.totalorder %s18, 1
      %p120 = por %p118, %p119
      %p121 = scmp.ne.s32.totalorder %s112, %s113
      %p122 = scmp.eq.s32.totalorder %s18, 0
      %p123 = por %p121, %p122
      %p124 = scmp.ne.s32.totalorder %s112, %s113
      %p125 = scmp.eq.s32.totalorder %s19, 1
      %p126 = por %p124, %p125
      %p128 = scmp.ne.s32.totalorder %s113, %s127
      %p129 = scmp.eq.s32.totalorder %s19, 0
      %p130 = por %p128, %p129
      %s131 = ssub.s32 %s13, %s20
      %p132 = scmp.eq.s32.totalorder %s131, 0
      %s134 = sadd.s32 %s133, 1
      %s135 = scalar_select %p132, %s133, %s134
      %p138 = pneg %p132
      %p139 = scmp.eq.s32.totalorder %s13, 1
      %p140 = por %p138, %p139
      %p141 = scmp.ne.s32.totalorder %s133, %s136
      %p142 = scmp.eq.s32.totalorder %s13, 0
      %p143 = por %p141, %p142
      %p144 = scmp.ne.s32.totalorder %s133, %s136
      %p145 = scmp.eq.s32.totalorder %s18, 1
      %p146 = por %p144, %p145
      %p147 = scmp.ne.s32.totalorder %s136, %s137
      %p148 = scmp.eq.s32.totalorder %s18, 0
      %p149 = por %p147, %p148
      %p150 = scmp.ne.s32.totalorder %s136, %s137
      %p151 = scmp.eq.s32.totalorder %s19, 1
      %p152 = por %p150, %p151
      %p154 = scmp.ne.s32.totalorder %s137, %s153
      %p155 = scmp.eq.s32.totalorder %s19, 0
      %p156 = por %p154, %p155
      %p157 = scmp.le.s32.totalorder 1, %s13
      %p158 = scmp.lt.s32.totalorder %s13, 3
      %p159 = pnand %p157, %p158
      %p160 = pneg %p159
      // Predicated region
      $region9: #{apply.1} parent=5 // pred_check
        _
      $region10: #{apply.1} parent=5 // pred_check_branch
        %162 = sbr.rel (%p159) target = $region12
      $region11: #{apply.1} parent=5 // pred_region
        %s163 = ssub.s32 %s13, 1
        // Predicated region
        $region13: #{apply.1} parent=11 // pred_check
          %p164 = pneg %p60
        $region14: #{apply.1} parent=11 // pred_check_branch
          %166 = sbr.rel (%p164) target = $region16
        $region15: #{apply.1} parent=11 // pred_region
          %s168 = ssub.s32 2048, 2048
          %169 = vsyncadd [#allocation3], %s168
          %s170 = sshll.u32 [#allocation2], 4
          %s171 = int_to_ptr.vmem [resolvable:$true] %s170
          %176 = dma.hbm_to_vmem [thread:$0]  %s1, 2048, %s171, [#allocation3], 128, 128, 8
        $region16: #{apply.1} parent=11 // pred_fallthru
          _
        // Predicated region
        $region17: #{apply.1} parent=11 // pred_check
          %p177 = pneg %p81
        $region18: #{apply.1} parent=11 // pred_check_branch
          %179 = sbr.rel (%p177) target = $region20
        $region19: #{apply.1} parent=11 // pred_region
          _
        $region20: #{apply.1} parent=11 // pred_fallthru
          _
        // Predicated region
        $region21: #{apply.1} parent=11 // pred_check
          %p180 = pneg %p102
        $region22: #{apply.1} parent=11 // pred_check_branch
          %182 = sbr.rel (%p180) target = $region24
        $region23: #{apply.1} parent=11 // pred_region
          %s184 = ssub.s32 2048, 2048
          %185 = vsyncadd [#allocation5], %s184
          %s186 = sshll.u32 [#allocation4], 4
          %s187 = int_to_ptr.vmem [resolvable:$true] %s186
          %192 = dma.hbm_to_vmem [thread:$0]  %s3, 2048, %s187, [#allocation5], 128, 128, 8
        $region24: #{apply.1} parent=11 // pred_fallthru
          _
        // Predicated region
        $region25: #{apply.1} parent=11 // pred_check
          %p193 = pneg %p123
        $region26: #{apply.1} parent=11 // pred_check_branch
          %195 = sbr.rel (%p193) target = $region28
        $region27: #{apply.1} parent=11 // pred_region
          _
        $region28: #{apply.1} parent=11 // pred_fallthru
          _
      $region12: #{apply.1} parent=5 // pred_fallthru
        _
      %p196 = scmp.lt.s32.totalorder %s13, 2
      // Predicated region
      $region29: #{apply.1} parent=5 // pred_check
        %p197 = pneg %p196
      $region30: #{apply.1} parent=5 // pred_check_branch
        %199 = sbr.rel (%p197) target = $region32
      $region31: #{apply.1} parent=5 // pred_region
        // Predicated region
        $region33: #{apply.1} parent=31 // pred_check
          %p200 = pneg %p33
        $region34: #{apply.1} parent=31 // pred_check_branch
          %202 = sbr.rel (%p200) target = $region36
        $region35: #{apply.1} parent=31 // pred_region
          %p203 = scmp.lt.s32.totalorder %s13, 1
          %s204 = scalar_select %p203, %s13, 1
          %s205 = smul.addr %s204, 8
          %s206 = scalar_lea.vmem %s0, %s205
        $region36: #{apply.1} parent=31 // pred_fallthru
          _
      $region32: #{apply.1} parent=5 // pred_fallthru
        _
      %p207 = scmp.le.s32.totalorder 1, %s13
      %p208 = scmp.lt.s32.totalorder %s13, 3
      %p209 = pnand %p207, %p208
      %p210 = pneg %p209
      // Predicated region
      $region37: #{apply.1} parent=5 // pred_check
        _
      $region38: #{apply.1} parent=5 // pred_check_branch
        %212 = sbr.rel (%p209) target = $region40
      $region39: #{apply.1} parent=5 // pred_region
        %s213 = ssub.s32 %s13, 1
        // Predicated region
        $region41: #{apply.1} parent=39 // pred_check
          %p214 = pneg %p60
        $region42: #{apply.1} parent=39 // pred_check_branch
          %216 = sbr.rel (%p214) target = $region44
        $region43: #{apply.1} parent=39 // pred_region
          %217 = dma.done [#allocation3], 2048
        $region44: #{apply.1} parent=39 // pred_fallthru
          _
        // Predicated region
        $region45: #{apply.1} parent=39 // pred_check
          %p218 = pneg %p102
        $region46: #{apply.1} parent=39 // pred_check_branch
          %220 = sbr.rel (%p218) target = $region48
        $region47: #{apply.1} parent=39 // pred_region
          %221 = dma.done [#allocation5], 2048
        $region48: #{apply.1} parent=39 // pred_fallthru
          _
        %p222 = scmp.lt.s32.totalorder %s18, 1
        %s223 = scalar_select %p222, %s18, 1
        %s224 = smul.addr %s223, 8
        %s225 = scalar_lea.vmem %s0, %s224
        %p226 = pneg %p39
        %p227 = pneg %p36
        %p228 = pneg %p60
        %p229 = pneg %p57
        %p230 = pneg %p81
        %p231 = pneg %p78
        %p232 = pneg %p102
        %p233 = pneg %p99
        %p234 = pneg %p123
        %p235 = pneg %p120
        %p236 = pneg %p149
        %p237 = pneg %p146
        %p238 = scmp.lt.s32.totalorder %s18, 1
        %s239 = scalar_select %p238, %s18, 1
        %s240 = smul.addr %s239, 8
        %s241 = scalar_lea.vmem %s5, %s240
        %p242 = scmp.lt.s32.totalorder %s18, 1
        %s243 = scalar_select %p242, %s18, 1
        %s244 = smul.addr %s243, 8
        %s245 = scalar_lea.vmem %s0, %s244
        %p246 = scmp.lt.s32.totalorder %s18, 1
        %s247 = scalar_select %p246, %s18, 1
        %s248 = smul.addr %s247, 8
        %s249 = scalar_lea.vmem %s5, %s248
        %v250 = vld [vmem:[%s245] sm:$0xff]
        %v251 = vld [vmem:[#allocation2] sm:$0xff]
        %v252 = vld [vmem:[#allocation2 + $0x8] sm:$0xff]
        %v253 = vld [vmem:[#allocation2 + $0x10] sm:$0xff]
        %v254 = vld [vmem:[#allocation2 + $0x18] sm:$0xff]
        %v255 = vld [vmem:[#allocation2 + $0x20] sm:$0xff]
        %v256 = vld [vmem:[#allocation2 + $0x28] sm:$0xff]
        %v257 = vld [vmem:[#allocation2 + $0x30] sm:$0xff]
        %v258 = vld [vmem:[#allocation2 + $0x38] sm:$0xff]
        %v259 = vld [vmem:[#allocation2 + $0x40] sm:$0xff]
        %v260 = vld [vmem:[#allocation2 + $0x48] sm:$0xff]
        %v261 = vld [vmem:[#allocation2 + $0x50] sm:$0xff]
        %v262 = vld [vmem:[#allocation2 + $0x58] sm:$0xff]
        %v263 = vld [vmem:[#allocation2 + $0x60] sm:$0xff]
        %v264 = vld [vmem:[#allocation2 + $0x68] sm:$0xff]
        %v265 = vld [vmem:[#allocation2 + $0x70] sm:$0xff]
        %v266 = vld [vmem:[#allocation2 + $0x78] sm:$0xff]
        %v267 = vld [vmem:[%s2] sm:$0x1]
        %v269 = vlaneseq
        %v270 = vshrl.u32 %v269, 7
        %v271 = vsub.s32 0, %v270
        %v272 = vrot.slane %v267, %v271
        %274 = vmatprep.subr.mxu0 0.0
        %275 = vmatpush1.msra.mxu0 %v266
        %276 = vmatprep.subr.mxu0 0.0
        %277 = vmatpush1.msra.mxu0 %v265
        %278 = vmatprep.subr.mxu0 0.0
        %279 = vmatpush1.msra.mxu0 %v264
        %280 = vmatprep.subr.mxu0 0.0
        %281 = vmatpush1.msra.mxu0 %v263
        %282 = vmatprep.subr.mxu0 0.0
        %283 = vmatpush1.msra.mxu0 %v262
        %284 = vmatprep.subr.mxu0 0.0
        %285 = vmatpush1.msra.mxu0 %v261
        %286 = vmatprep.subr.mxu0 0.0
        %287 = vmatpush1.msra.mxu0 %v260
        %288 = vmatprep.subr.mxu0 0.0
        %289 = vmatpush1.msra.mxu0 %v259
        %290 = vmatprep.subr.mxu0 0.0
        %291 = vmatpush1.msra.mxu0 %v258
        %292 = vmatprep.subr.mxu0 0.0
        %293 = vmatpush1.msra.mxu0 %v257
        %294 = vmatprep.subr.mxu0 0.0
        %295 = vmatpush1.msra.mxu0 %v256
        %296 = vmatprep.subr.mxu0 0.0
        %297 = vmatpush1.msra.mxu0 %v255
        %298 = vmatprep.subr.mxu0 0.0
        %299 = vmatpush1.msra.mxu0 %v254
        %300 = vmatprep.subr.mxu0 0.0
        %301 = vmatpush1.msra.mxu0 %v253
        %302 = vmatprep.subr.mxu0 0.0
        %303 = vmatpush1.msra.mxu0 %v252
        %304 = vmatprep.subr.mxu0 0.0
        %305 = vmatpush1.msra.mxu0 %v251
        %306 = vmatprep.subr.mxu0 0.0
        %307 = vmatpush2.msra.mxu0 0.0
        %308 = vmatprep.subr.mxu0 0.0
        %309 = vmatpush2.msra.mxu0 0.0
        %310 = vmatprep.subr.mxu0 0.0
        %311 = vmatpush2.msra.mxu0 0.0
        %312 = vmatprep.subr.mxu0 0.0
        %313 = vmatpush2.msra.mxu0 0.0
        %314 = vmatprep.subr.mxu0 0.0
        %315 = vmatpush2.msra.mxu0 0.0
        %316 = vmatprep.subr.mxu0 0.0
        %317 = vmatpush2.msra.mxu0 0.0
        %318 = vmatprep.subr.mxu0 0.0
        %319 = vmatpush2.msra.mxu0 0.0
        %320 = vmatprep.subr.mxu0 0.0
        %321 = vmatpush2.msra.mxu0 0.0
        %322 = vmatprep.subr.mxu0 0.0
        %323 = vmatpush2.msra.mxu0 0.0
        %324 = vmatprep.subr.mxu0 0.0
        %325 = vmatpush2.msra.mxu0 0.0
        %326 = vmatprep.subr.mxu0 0.0
        %327 = vmatpush2.msra.mxu0 0.0
        %328 = vmatprep.subr.mxu0 0.0
        %329 = vmatpush2.msra.mxu0 0.0
        %330 = vmatprep.subr.mxu0 0.0
        %331 = vmatpush2.msra.mxu0 0.0
        %332 = vmatprep.subr.mxu0 0.0
        %333 = vmatpush2.msra.mxu0 0.0
        %334 = vmatprep.subr.mxu0 0.0
        %335 = vmatpush2.msra.mxu0 0.0
        %336 = vmatprep.subr.mxu0 0.0
        %337 = vmatpush2.msra.mxu0 0.0
        %338 = vmatprep.mubr.f32.mxu0 0.0
        %339 = vmatmul.mubr.f32.gmra.mxu0 %v250
        %v340 = vpop.f32.mrf.mxu0
        %v341 = vadd.f32 %v272, %v340
        %v342 = vpop.f32.mrf.mxu0
        %343 = vdwg.mxu0
        %v344 = vmax.f32 %v341, 0.0
        %v345 = vld [vmem:[#allocation4] sm:$0xff]
        %v346 = vld [vmem:[#allocation4 + $0x8] sm:$0xff]
        %v347 = vld [vmem:[#allocation4 + $0x10] sm:$0xff]
        %v348 = vld [vmem:[#allocation4 + $0x18] sm:$0xff]
        %v349 = vld [vmem:[#allocation4 + $0x20] sm:$0xff]
        %v350 = vld [vmem:[#allocation4 + $0x28] sm:$0xff]
        %v351 = vld [vmem:[#allocation4 + $0x30] sm:$0xff]
        %v352 = vld [vmem:[#allocation4 + $0x38] sm:$0xff]
        %v353 = vld [vmem:[#allocation4 + $0x40] sm:$0xff]
        %v354 = vld [vmem:[#allocation4 + $0x48] sm:$0xff]
        %v355 = vld [vmem:[#allocation4 + $0x50] sm:$0xff]
        %v356 = vld [vmem:[#allocation4 + $0x58] sm:$0xff]
        %v357 = vld [vmem:[#allocation4 + $0x60] sm:$0xff]
        %v358 = vld [vmem:[#allocation4 + $0x68] sm:$0xff]
        %v359 = vld [vmem:[#allocation4 + $0x70] sm:$0xff]
        %v360 = vld [vmem:[#allocation4 + $0x78] sm:$0xff]
        %361 = vmatprep.subr.mxu0 0.0
        %362 = vmatpush1.msra.mxu0 %v360
        %363 = vmatprep.subr.mxu0 0.0
        %364 = vmatpush1.msra.mxu0 %v359
        %365 = vmatprep.subr.mxu0 0.0
        %366 = vmatpush1.msra.mxu0 %v358
        %367 = vmatprep.subr.mxu0 0.0
        %368 = vmatpush1.msra.mxu0 %v357
        %369 = vmatprep.subr.mxu0 0.0
        %370 = vmatpush1.msra.mxu0 %v356
        %371 = vmatprep.subr.mxu0 0.0
        %372 = vmatpush1.msra.mxu0 %v355
        %373 = vmatprep.subr.mxu0 0.0
        %374 = vmatpush1.msra.mxu0 %v354
        %375 = vmatprep.subr.mxu0 0.0
        %376 = vmatpush1.msra.mxu0 %v353
        %377 = vmatprep.subr.mxu0 0.0
        %378 = vmatpush1.msra.mxu0 %v352
        %379 = vmatprep.subr.mxu0 0.0
        %380 = vmatpush1.msra.mxu0 %v351
        %381 = vmatprep.subr.mxu0 0.0
        %382 = vmatpush1.msra.mxu0 %v350
        %383 = vmatprep.subr.mxu0 0.0
        %384 = vmatpush1.msra.mxu0 %v349
        %385 = vmatprep.subr.mxu0 0.0
        %386 = vmatpush1.msra.mxu0 %v348
        %387 = vmatprep.subr.mxu0 0.0
        %388 = vmatpush1.msra.mxu0 %v347
        %389 = vmatprep.subr.mxu0 0.0
        %390 = vmatpush1.msra.mxu0 %v346
        %391 = vmatprep.subr.mxu0 0.0
        %392 = vmatpush1.msra.mxu0 %v345
        %393 = vmatprep.subr.mxu0 0.0
        %394 = vmatpush2.msra.mxu0 0.0
        %395 = vmatprep.subr.mxu0 0.0
        %396 = vmatpush2.msra.mxu0 0.0
        %397 = vmatprep.subr.mxu0 0.0
        %398 = vmatpush2.msra.mxu0 0.0
        %399 = vmatprep.subr.mxu0 0.0
        %400 = vmatpush2.msra.mxu0 0.0
        %401 = vmatprep.subr.mxu0 0.0
        %402 = vmatpush2.msra.mxu0 0.0
        %403 = vmatprep.subr.mxu0 0.0
        %404 = vmatpush2.msra.mxu0 0.0
        %405 = vmatprep.subr.mxu0 0.0
        %406 = vmatpush2.msra.mxu0 0.0
        %407 = vmatprep.subr.mxu0 0.0
        %408 = vmatpush2.msra.mxu0 0.0
        %409 = vmatprep.subr.mxu0 0.0
        %410 = vmatpush2.msra.mxu0 0.0
        %411 = vmatprep.subr.mxu0 0.0
        %412 = vmatpush2.msra.mxu0 0.0
        %413 = vmatprep.subr.mxu0 0.0
        %414 = vmatpush2.msra.mxu0 0.0
        %415 = vmatprep.subr.mxu0 0.0
        %416 = vmatpush2.msra.mxu0 0.0
        %417 = vmatprep.subr.mxu0 0.0
        %418 = vmatpush2.msra.mxu0 0.0
        %419 = vmatprep.subr.mxu0 0.0
        %420 = vmatpush2.msra.mxu0 0.0
        %421 = vmatprep.subr.mxu0 0.0
        %422 = vmatpush2.msra.mxu0 0.0
        %423 = vmatprep.subr.mxu0 0.0
        %424 = vmatpush2.msra.mxu0 0.0
        %425 = vmatprep.mubr.f32.mxu0 0.0
        %426 = vmatmul.mubr.f32.gmra.mxu0 %v344
        %v427 = vpop.f32.mrf.mxu0
        %v428 = vadd.f32 %v250, %v427
        %v429 = vpop.f32.mrf.mxu0
        %430 = vdwg.mxu0
        %v431 = vld [vmem:[%s4] sm:$0x1]
        %v433 = vlaneseq
        %v434 = vshrl.u32 %v433, 7
        %v435 = vsub.s32 0, %v434
        %v436 = vrot.slane %v431, %v435
        %v438 = vadd.f32 %v428, %v436
        %439 = vst [vmem:[%s249] sm:$0xff] %v438
        %p440 = scmp.lt.s32.totalorder %s18, 1
        %s441 = scalar_select %p440, %s18, 1
        %s442 = smul.addr %s441, 8
        %s443 = scalar_lea.vmem %s5, %s442
        // Predicated region
        $region49: #{apply.1} parent=39 // pred_check
          %p444 = pneg %p146
        $region50: #{apply.1} parent=39 // pred_check_branch
          %446 = sbr.rel (%p444) target = $region52
        $region51: #{apply.1} parent=39 // pred_region
          _
        $region52: #{apply.1} parent=39 // pred_fallthru
          _
      $region40: #{apply.1} parent=5 // pred_fallthru
        _
      %p447 = scmp.le.s32.totalorder 2, %s13
      // Predicated region
      $region53: #{apply.1} parent=5 // pred_check
        %p448 = pneg %p447
      $region54: #{apply.1} parent=5 // pred_check_branch
        %450 = sbr.rel (%p448) target = $region56
      $region55: #{apply.1} parent=5 // pred_region
        %s451 = ssub.s32 %s13, 2
        // Predicated region
        $region57: #{apply.1} parent=55 // pred_check
          %p452 = pneg %p152
        $region58: #{apply.1} parent=55 // pred_check_branch
          %454 = sbr.rel (%p452) target = $region60
        $region59: #{apply.1} parent=55 // pred_region
          %p455 = scmp.lt.s32.totalorder %s19, 1
          %s456 = scalar_select %p455, %s19, 1
          %s457 = smul.addr %s456, 8
          %s458 = scalar_lea.vmem %s5, %s457
        $region60: #{apply.1} parent=55 // pred_fallthru
          _
      $region56: #{apply.1} parent=5 // pred_fallthru
        _
    $region6: #{apply.1} parent=1 // loop_footer
      %s17 = sadd.s32 1, %s13
    $region7: #{apply.1} parent=1 // loop_footer_branch
      %12 = sbr.rel target = $region3
    $region8: #{apply.1} parent=1 // loop_exit
      _
    %459 = vsyncpa [#allocation3], 1
    %s460 = scalar_lea.sflag [#allocation3], 1
    %461 = vsyncpa %s460, 1
    %462 = vsyncpa [#allocation5], 1

</llo_original>
